<compile_context>
chip_gen: v7x
topology: tpu7x:2x2x1
jax: 0.10.0
libtpu: 0.0.40
codegen_flags: <defaults>
</compile_context>

<pallas_src>
import jax
import jax.numpy as jnp
from jax.experimental import pallas as pl
from jax.experimental.pallas import tpu as pltpu


_VMEM = pl.BlockSpec(memory_space=pltpu.MemorySpace.VMEM)


# -----------------------------------------------------------------------------
# Kernels
# -----------------------------------------------------------------------------
def _cell_kernel(x_ref, xprev_ref, w_in_ref, w_rec_ref, b_ref, o_ref):
    """One recurrent update: tanh(x @ W_in + x_prev @ W_rec + b), all f32."""
    a = jnp.dot(x_ref[...], w_in_ref[...], preferred_element_type=jnp.float32)
    a = a + jnp.dot(xprev_ref[...], w_rec_ref[...],
                    preferred_element_type=jnp.float32)
    a = a + b_ref[...]                       # (1, N) broadcasts over rows
    o_ref[...] = jnp.tanh(a).astype(o_ref.dtype)


def _rollout_kernel(xs_ref, h0_ref, w_in_ref, w_rec_ref, b_ref, o_ref):
    """T fused recurrent updates in a single kernel invocation.

    xs_ref: (T*B, I)   h0_ref: (B, N)   o_ref: (T*B, N)
    """
    B = h0_ref.shape[0]
    T = xs_ref.shape[0] // B

    # Hoisted batched input projection (independent of h): one MXU call with
    # M = T*B rows, plus the bias add, entirely off the serial critical path.
    p = jnp.dot(xs_ref[...], w_in_ref[...], preferred_element_type=jnp.float32)
    p = p + b_ref[...]

    w_rec = w_rec_ref[...]
    h = h0_ref[...].astype(jnp.float32)

    # T is a small static trip count -> fully unrolled recurrence (equivalent
    # to lax.fori_loop(..., unroll=True)); all slices are static and B=8 rows
    # align with the 8-row sublane tile.
    for t in range(T):
        a = p[t * B:(t + 1) * B, :] + jnp.dot(
            h, w_rec, preferred_element_type=jnp.float32)
        h = jnp.tanh(a)
        o_ref[t * B:(t + 1) * B, :] = h.astype(o_ref.dtype)


# -----------------------------------------------------------------------------
# Wrappers
# -----------------------------------------------------------------------------
def layer2_forward(x, x_prev, step, W_in, b_in, W_rec):
    """Pallas-backed Layer2.forward (single step, matches the PyTorch module).

    x:      (B, num_inputs)  float32
    x_prev: (B, num_outputs) float32
    step:   Python int (static branch, like the PyTorch module)
    """
    if step % 2 == 0:
        return x_prev                                   # nn.Identity()

    B = x.shape[0]
    N = W_in.shape[1]
    b2d = b_in.reshape(1, N).astype(jnp.float32)

    return pl.pallas_call(
        _cell_kernel,
        out_shape=jax.ShapeDtypeStruct((B, N), x.dtype),
        in_specs=[_VMEM] * 5,
        out_specs=_VMEM,
    )(x, x_prev, W_in, W_rec, b2d)


def layer2_rollout(xs, h0, W_in, b_in, W_rec):
    """Fused multi-step rollout: T applications of the odd-step update in ONE
    pallas_call.  NOTE: this is equivalent to the PyTorch module only when the
    caller strictly interleaves even(identity)/odd(update) steps, so the
    sequence of odd-step outputs is exactly T cell applications.

    xs: (T, B, num_inputs)   h0: (B, num_outputs)
    returns hs: (T, B, num_outputs), hs[t] = tanh(xs[t] @ W_in + hs[t-1] @ W_rec + b)
    """
    T, B, I = xs.shape
    N = W_in.shape[1]
    b2d = b_in.reshape(1, N).astype(jnp.float32)
    xs2d = xs.reshape(T * B, I)            # row-major contiguous -> free in XLA

    out2d = pl.pallas_call(
        _rollout_kernel,
        out_shape=jax.ShapeDtypeStruct((T * B, N), xs.dtype),
        in_specs=[_VMEM] * 5,
        out_specs=_VMEM,
    )(xs2d, h0, W_in, W_rec, b2d)
    return out2d.reshape(T, B, N)


def xavier_uniform(key, shape, dtype=jnp.float32):
    fan_in, fan_out = shape
    bound = (6.0 / (fan_in + fan_out)) ** 0.5
    return jax.random.uniform(key, shape, dtype, minval=-bound, maxval=bound)


if __name__ == "__main__":
    key = jax.random.PRNGKey(0)
    k_x, k_xprev, k_win, k_wrec, k_xs = jax.random.split(key, 5)

    B, num_inputs, num_outputs, T = 8, 32, 32, 8

    x = jax.random.normal(k_x, (B, num_inputs), jnp.float32)
    x_prev = jax.random.normal(k_xprev, (B, num_outputs), jnp.float32)

    W_in = xavier_uniform(k_win, (num_inputs, num_outputs))
    b_in = jnp.zeros((num_outputs,), jnp.float32)
    W_rec = xavier_uniform(k_wrec, (num_outputs, num_outputs))

    # --- odd step: two-dot f32 kernel ----------------------------------------
    z = layer2_forward(x, x_prev, step=1, W_in=W_in, b_in=b_in, W_rec=W_rec)
    jax.block_until_ready(z)
    ref = jnp.tanh(x @ W_in + x_prev @ W_rec + b_in)
    assert jnp.allclose(z, ref, atol=2e-2, rtol=2e-2), "single-step mismatch"

    # --- even step: identity path --------------------------------------------
    z_even = layer2_forward(x, x_prev, step=2, W_in=W_in, b_in=b_in,
                            W_rec=W_rec)
    jax.block_until_ready(z_even)
    assert jnp.array_equal(z_even, x_prev), "identity mismatch"

    # --- fused multi-step rollout: one pallas_call for T updates --------------
    xs = jax.random.normal(k_xs, (T, B, num_inputs), jnp.float32)
    hs = layer2_rollout(xs, x_prev, W_in, b_in, W_rec)
    jax.block_until_ready(hs)

    h = x_prev
    ref_list = []
    for t in range(T):
        h = jnp.tanh(xs[t] @ W_in + h @ W_rec + b_in)
        ref_list.append(h)
    ref_hs = jnp.stack(ref_list)
    assert jnp.allclose(hs, ref_hs, atol=3e-2, rtol=3e-2), "rollout mismatch"

    print("KERNEL_OK")
</pallas_src>

<mosaic_0001>
module attributes {stable_mosaic.version = 11 : i64} {
  func.func @_cell_kernel(%arg0: memref<8x32xf32, #tpu.memory_space<vmem>>, %arg1: memref<8x32xf32, #tpu.memory_space<vmem>>, %arg2: memref<32x32xf32, #tpu.memory_space<vmem>>, %arg3: memref<32x32xf32, #tpu.memory_space<vmem>>, %arg4: memref<1x32xf32, #tpu.memory_space<vmem>>, %arg5: memref<8x32xf32, #tpu.memory_space<vmem>>) attributes {dimension_semantics = [], scalar_prefetch = 0 : i64, scratch_operands = 0 : i64, tpu.core_type = #tpu.core_type<tc>} {
    %c0 = arith.constant 0 : index
    %c0_0 = arith.constant 0 : index
    %0 = vector.load %arg0[%c0, %c0_0] : memref<8x32xf32, #tpu.memory_space<vmem>>, vector<8x32xf32>
    %c0_1 = arith.constant 0 : index
    %c0_2 = arith.constant 0 : index
    %1 = vector.load %arg2[%c0_1, %c0_2] : memref<32x32xf32, #tpu.memory_space<vmem>>, vector<32x32xf32>
    %cst = arith.constant dense<0.000000e+00> : vector<8x32xf32>
    %2 = tpu.matmul %0, %1, %cst {dimension_numbers = #tpu.dot_dimension_numbers<[1], [0], [0], [1], [0, 0, 1, 1], [], []>} : vector<8x32xf32>, vector<32x32xf32>, vector<8x32xf32> -> vector<8x32xf32>
    %c0_3 = arith.constant 0 : index
    %c0_4 = arith.constant 0 : index
    %3 = vector.load %arg1[%c0_3, %c0_4] : memref<8x32xf32, #tpu.memory_space<vmem>>, vector<8x32xf32>
    %c0_5 = arith.constant 0 : index
    %c0_6 = arith.constant 0 : index
    %4 = vector.load %arg3[%c0_5, %c0_6] : memref<32x32xf32, #tpu.memory_space<vmem>>, vector<32x32xf32>
    %cst_7 = arith.constant dense<0.000000e+00> : vector<8x32xf32>
    %5 = tpu.matmul %3, %4, %cst_7 {dimension_numbers = #tpu.dot_dimension_numbers<[1], [0], [0], [1], [0, 0, 1, 1], [], []>} : vector<8x32xf32>, vector<32x32xf32>, vector<8x32xf32> -> vector<8x32xf32>
    %6 = arith.addf %2, %5 : vector<8x32xf32>
    %c0_8 = arith.constant 0 : index
    %c0_9 = arith.constant 0 : index
    %7 = vector.load %arg4[%c0_8, %c0_9] : memref<1x32xf32, #tpu.memory_space<vmem>>, vector<1x32xf32>
    %8 = vector.broadcast %7 : vector<1x32xf32> to vector<8x32xf32>
    %9 = arith.addf %6, %8 : vector<8x32xf32>
    %10 = math.tanh %9 : vector<8x32xf32>
    %c0_10 = arith.constant 0 : index
    %c0_11 = arith.constant 0 : index
    %11 = vector.load %arg5[%c0_10, %c0_11] : memref<8x32xf32, #tpu.memory_space<vmem>>, vector<8x32xf32>
    tpu.vector_store %arg5[%c0_10, %c0_11], %10 {strides = array<i32>} : memref<8x32xf32, #tpu.memory_space<vmem>>, vector<8x32xf32>,
    return
  }
}

</mosaic_0001>

<llo_original>
// kernel: tpu_custom_call.1
$region0: #{tpu_custom_call.1}
  #allocation0 [shape = 'u32[]', space=smem, size = 0x4, offset = 0x4, fixed_abs, tag = 'smem constant byte address 0x4 - core index']
  #allocation1 [shape = 'u32[144,128]{1,0:T(1,128)}', space=vmem, size = 0x12000, scoped, tag = 'internal scratch']
  %s0 = inlined_call_operand.hbm [shape: f32[8,32], index: 0, kind: input, shape index: {}]
  %s1 = inlined_call_operand.hbm [shape: f32[8,32], index: 1, kind: input, shape index: {}]
  %s2 = inlined_call_operand.hbm [shape: f32[32,32], index: 2, kind: input, shape index: {}]
  %s3 = inlined_call_operand.hbm [shape: f32[32,32], index: 3, kind: input, shape index: {}]
  %s4 = inlined_call_operand.vmem [shape: f32[1,32], index: 4, kind: input, shape index: {}]
  %s5 = inlined_call_operand.hbm [shape: f32[8,32], index: 5, kind: output, shape index: {}]
  %s6 = sld [smem:[#allocation0]]
  $region46: #{tpu_custom_call.1} parent=0
    _
  %s8 = ssub.s32 1, %s6
  %s9 = scalar_select 0, %s8, %s6
  $region1: #{tpu_custom_call.1} parent=0
    #allocation2 [shape = 'u8[4096]{0}', space=vmem, size = 0x1000, scoped, tag = 'input window, operand 0, single buffered']
    #allocation3 [shape = 's32[1]{0}', space=sflag, size = 0x4, scoped, tag = 'scoped memory for tpu_custom_call.1']
    #allocation4 [shape = 's32[1]{0}', space=sflag, size = 0x4, scoped, tag = 'scoped memory for tpu_custom_call.1']
    #allocation5 [shape = 'u8[4096]{0}', space=vmem, size = 0x1000, scoped, tag = 'input window, operand 1, single buffered']
    #allocation6 [shape = 's32[1]{0}', space=sflag, size = 0x4, scoped, tag = 'scoped memory for tpu_custom_call.1']
    #allocation7 [shape = 'u8[16384]{0}', space=vmem, size = 0x4000, scoped, tag = 'input window, operand 2, single buffered']
    #allocation8 [shape = 'u8[16384]{0}', space=vmem, size = 0x4000, scoped, tag = 'input window, operand 3, single buffered']
    #allocation9 [shape = 's32[1]{0}', space=sflag, size = 0x4, scoped, tag = 'scoped memory for tpu_custom_call.1']
    #allocation10 [shape = 'u8[4096]{0}', space=vmem, size = 0x1000, scoped, tag = 'output window, operand 0, single buffered']
    %10 = vsyncpa [#allocation3], 0
    %11 = vsyncpa [#allocation6], 0
    %12 = vsyncpa [#allocation9], 0
    %13 = vsyncpa [#allocation4], 0
    // Predicated region
    $region2: #{tpu_custom_call.1} parent=1 // pred_check
      _
    $region3: #{tpu_custom_call.1} parent=1 // pred_check_branch
      %15 = sbr.rel (0) target = $region5
    $region4: #{tpu_custom_call.1} parent=1 // pred_region
      %s17 = ssub.s32 128, 128
      %18 = vsyncadd [#allocation3], %s17
      %s20 = sshll.u32 [#allocation2], 4
      %s21 = int_to_ptr.vmem [resolvable:$true] %s20
      %23 = dma.hbm_to_vmem [thread:$0]  %s0, 128, %s21, [#allocation3]
    $region5: #{tpu_custom_call.1} parent=1 // pred_fallthru
      _
    // Predicated region
    $region6: #{tpu_custom_call.1} parent=1 // pred_check
      _
    $region7: #{tpu_custom_call.1} parent=1 // pred_check_branch
      %25 = sbr.rel (0) target = $region9
    $region8: #{tpu_custom_call.1} parent=1 // pred_region
      %s27 = ssub.s32 128, 128
      %28 = vsyncadd [#allocation6], %s27
      %s30 = sshll.u32 [#allocation5], 4
      %s31 = int_to_ptr.vmem [resolvable:$true] %s30
      %33 = dma.hbm_to_vmem [thread:$0]  %s1, 128, %s31, [#allocation6]
    $region9: #{tpu_custom_call.1} parent=1 // pred_fallthru
      _
    // Predicated region
    $region10: #{tpu_custom_call.1} parent=1 // pred_check
      _
    $region11: #{tpu_custom_call.1} parent=1 // pred_check_branch
      %35 = sbr.rel (0) target = $region13
    $region12: #{tpu_custom_call.1} parent=1 // pred_region
      %s37 = ssub.s32 512, 512
      %38 = vsyncadd [#allocation6], %s37
      %s39 = sshll.u32 [#allocation7], 4
      %s40 = int_to_ptr.vmem [resolvable:$true] %s39
      %45 = dma.hbm_to_vmem [thread:$0]  %s2, 512, %s40, [#allocation6], 128, 128, 8
    $region13: #{tpu_custom_call.1} parent=1 // pred_fallthru
      _
    // Predicated region
    $region14: #{tpu_custom_call.1} parent=1 // pred_check
      _
    $region15: #{tpu_custom_call.1} parent=1 // pred_check_branch
      %47 = sbr.rel (0) target = $region17
    $region16: #{tpu_custom_call.1} parent=1 // pred_region
      %s49 = ssub.s32 512, 512
      %50 = vsyncadd [#allocation9], %s49
      %s51 = sshll.u32 [#allocation8], 4
      %s52 = int_to_ptr.vmem [resolvable:$true] %s51
      %57 = dma.hbm_to_vmem [thread:$0]  %s3, 512, %s52, [#allocation9], 128, 128, 8
    $region17: #{tpu_custom_call.1} parent=1 // pred_fallthru
      _
    // Predicated region
    $region18: #{tpu_custom_call.1} parent=1 // pred_check
      _
    $region19: #{tpu_custom_call.1} parent=1 // pred_check_branch
      %59 = sbr.rel (0) target = $region21
    $region20: #{tpu_custom_call.1} parent=1 // pred_region
      _
    $region21: #{tpu_custom_call.1} parent=1 // pred_fallthru
      _
    // Predicated region
    $region22: #{tpu_custom_call.1} parent=1 // pred_check
      _
    $region23: #{tpu_custom_call.1} parent=1 // pred_check_branch
      %61 = sbr.rel (0) target = $region25
    $region24: #{tpu_custom_call.1} parent=1 // pred_region
      %62 = dma.done [#allocation3], 128
    $region25: #{tpu_custom_call.1} parent=1 // pred_fallthru
      _
    // Predicated region
    $region26: #{tpu_custom_call.1} parent=1 // pred_check
      _
    $region27: #{tpu_custom_call.1} parent=1 // pred_check_branch
      %64 = sbr.rel (0) target = $region29
    $region28: #{tpu_custom_call.1} parent=1 // pred_region
      %65 = dma.done [#allocation6], 128
    $region29: #{tpu_custom_call.1} parent=1 // pred_fallthru
      _
    // Predicated region
    $region30: #{tpu_custom_call.1} parent=1 // pred_check
      _
    $region31: #{tpu_custom_call.1} parent=1 // pred_check_branch
      %67 = sbr.rel (0) target = $region33
    $region32: #{tpu_custom_call.1} parent=1 // pred_region
      %68 = dma.done [#allocation6], 512
    $region33: #{tpu_custom_call.1} parent=1 // pred_fallthru
      _
    // Predicated region
    $region34: #{tpu_custom_call.1} parent=1 // pred_check
      _
    $region35: #{tpu_custom_call.1} parent=1 // pred_check_branch
      %70 = sbr.rel (0) target = $region37
    $region36: #{tpu_custom_call.1} parent=1 // pred_region
      %71 = dma.done [#allocation9], 512
    $region37: #{tpu_custom_call.1} parent=1 // pred_fallthru
      _
    %v72 = vld [vmem:[#allocation2] sm:$0xff]
    %v73 = vld [vmem:[#allocation7] sm:$0xff]
    %v74 = vld [vmem:[#allocation7 + $0x8] sm:$0xff]
    %v75 = vld [vmem:[#allocation7 + $0x10] sm:$0xff]
    %v76 = vld [vmem:[#allocation7 + $0x18] sm:$0xff]
    %v77 = vld [vmem:[#allocation5] sm:$0xff]
    %v78 = vld [vmem:[#allocation8] sm:$0xff]
    %v79 = vld [vmem:[#allocation8 + $0x8] sm:$0xff]
    %v80 = vld [vmem:[#allocation8 + $0x10] sm:$0xff]
    %v81 = vld [vmem:[#allocation8 + $0x18] sm:$0xff]
    %vm82 = vcmask 261120
    %v84 = vsel %vm82, %v77, 0
    %86 = vmatprep.subr.mxu0 0.0
    %87 = vmatpush1.msra.mxu0 %v78
    %88 = vmatprep.subr.mxu0 0.0
    %89 = vmatpush1.msra.mxu0 %v79
    %90 = vmatprep.subr.mxu0 0.0
    %91 = vmatpush1.msra.mxu0 %v80
    %92 = vmatprep.subr.mxu0 0.0
    %93 = vmatpush1.msra.mxu0 %v81
    %94 = vmatprep.subr.mxu0 0.0
    %95 = vmatpush1.msra.mxu0 0.0
    %96 = vmatprep.subr.mxu0 0.0
    %97 = vmatpush1.msra.mxu0 0.0
    %98 = vmatprep.subr.mxu0 0.0
    %99 = vmatpush1.msra.mxu0 0.0
    %100 = vmatprep.subr.mxu0 0.0
    %101 = vmatpush1.msra.mxu0 0.0
    %102 = vmatprep.subr.mxu0 0.0
    %103 = vmatpush1.msra.mxu0 0.0
    %104 = vmatprep.subr.mxu0 0.0
    %105 = vmatpush1.msra.mxu0 0.0
    %106 = vmatprep.subr.mxu0 0.0
    %107 = vmatpush1.msra.mxu0 0.0
    %108 = vmatprep.subr.mxu0 0.0
    %109 = vmatpush1.msra.mxu0 0.0
    %110 = vmatprep.subr.mxu0 0.0
    %111 = vmatpush1.msra.mxu0 0.0
    %112 = vmatprep.subr.mxu0 0.0
    %113 = vmatpush1.msra.mxu0 0.0
    %114 = vmatprep.subr.mxu0 0.0
    %115 = vmatpush1.msra.mxu0 0.0
    %116 = vmatprep.subr.mxu0 0.0
    %117 = vmatpush1.msra.mxu0 0.0
    %118 = vmatprep.subr.mxu0 0.0
    %119 = vmatpush1.msra.mxu0 0.0
    %120 = vmatprep.subr.mxu0 0.0
    %121 = vmatpush1.msra.mxu0 0.0
    %122 = vmatprep.subr.mxu0 0.0
    %123 = vmatpush1.msra.mxu0 0.0
    %124 = vmatprep.subr.mxu0 0.0
    %125 = vmatpush1.msra.mxu0 0.0
    %126 = vmatprep.subr.mxu0 0.0
    %127 = vmatpush1.msra.mxu0 0.0
    %128 = vmatprep.subr.mxu0 0.0
    %129 = vmatpush1.msra.mxu0 0.0
    %130 = vmatprep.subr.mxu0 0.0
    %131 = vmatpush1.msra.mxu0 0.0
    %132 = vmatprep.subr.mxu0 0.0
    %133 = vmatpush1.msra.mxu0 0.0
    %134 = vmatprep.subr.mxu0 0.0
    %135 = vmatpush1.msra.mxu0 0.0
    %136 = vmatprep.subr.mxu0 0.0
    %137 = vmatpush1.msra.mxu0 0.0
    %138 = vmatprep.subr.mxu0 0.0
    %139 = vmatpush1.msra.mxu0 0.0
    %140 = vmatprep.subr.mxu0 0.0
    %141 = vmatpush1.msra.mxu0 0.0
    %142 = vmatprep.subr.mxu0 0.0
    %143 = vmatpush1.msra.mxu0 0.0
    %144 = vmatprep.subr.mxu0 0.0
    %145 = vmatpush1.msra.mxu0 0.0
    %146 = vmatprep.subr.mxu0 0.0
    %147 = vmatpush1.msra.mxu0 0.0
    %148 = vmatprep.subr.mxu0 0.0
    %149 = vmatpush1.msra.mxu0 0.0
    %150 = vmatprep.mubr.f32.mxu0 0.0
    %151 = vmatmul.mubr.f32.gmra.mrb[0].mxu0 %v84
    %v152 = vpop.f32.mrb[0].mxu0
    %v153 = vadd.f32 0.0, %v152
    %v154 = vpop.f32.mrb[0].mxu0
    %155 = vdwg.mxu0
    %v157 = vsel %vm82, %v72, 0
    %159 = vmatprep.subr.mxu0 0.0
    %160 = vmatpush1.msra.mxu0 %v73
    %161 = vmatprep.subr.mxu0 0.0
    %162 = vmatpush1.msra.mxu0 %v74
    %163 = vmatprep.subr.mxu0 0.0
    %164 = vmatpush1.msra.mxu0 %v75
    %165 = vmatprep.subr.mxu0 0.0
    %166 = vmatpush1.msra.mxu0 %v76
    %167 = vmatprep.subr.mxu0 0.0
    %168 = vmatpush1.msra.mxu0 0.0
    %169 = vmatprep.subr.mxu0 0.0
    %170 = vmatpush1.msra.mxu0 0.0
    %171 = vmatprep.subr.mxu0 0.0
    %172 = vmatpush1.msra.mxu0 0.0
    %173 = vmatprep.subr.mxu0 0.0
    %174 = vmatpush1.msra.mxu0 0.0
    %175 = vmatprep.subr.mxu0 0.0
    %176 = vmatpush1.msra.mxu0 0.0
    %177 = vmatprep.subr.mxu0 0.0
    %178 = vmatpush1.msra.mxu0 0.0
    %179 = vmatprep.subr.mxu0 0.0
    %180 = vmatpush1.msra.mxu0 0.0
    %181 = vmatprep.subr.mxu0 0.0
    %182 = vmatpush1.msra.mxu0 0.0
    %183 = vmatprep.subr.mxu0 0.0
    %184 = vmatpush1.msra.mxu0 0.0
    %185 = vmatprep.subr.mxu0 0.0
    %186 = vmatpush1.msra.mxu0 0.0
    %187 = vmatprep.subr.mxu0 0.0
    %188 = vmatpush1.msra.mxu0 0.0
    %189 = vmatprep.subr.mxu0 0.0
    %190 = vmatpush1.msra.mxu0 0.0
    %191 = vmatprep.subr.mxu0 0.0
    %192 = vmatpush1.msra.mxu0 0.0
    %193 = vmatprep.subr.mxu0 0.0
    %194 = vmatpush1.msra.mxu0 0.0
    %195 = vmatprep.subr.mxu0 0.0
    %196 = vmatpush1.msra.mxu0 0.0
    %197 = vmatprep.subr.mxu0 0.0
    %198 = vmatpush1.msra.mxu0 0.0
    %199 = vmatprep.subr.mxu0 0.0
    %200 = vmatpush1.msra.mxu0 0.0
    %201 = vmatprep.subr.mxu0 0.0
    %202 = vmatpush1.msra.mxu0 0.0
    %203 = vmatprep.subr.mxu0 0.0
    %204 = vmatpush1.msra.mxu0 0.0
    %205 = vmatprep.subr.mxu0 0.0
    %206 = vmatpush1.msra.mxu0 0.0
    %207 = vmatprep.subr.mxu0 0.0
    %208 = vmatpush1.msra.mxu0 0.0
    %209 = vmatprep.subr.mxu0 0.0
    %210 = vmatpush1.msra.mxu0 0.0
    %211 = vmatprep.subr.mxu0 0.0
    %212 = vmatpush1.msra.mxu0 0.0
    %213 = vmatprep.subr.mxu0 0.0
    %214 = vmatpush1.msra.mxu0 0.0
    %215 = vmatprep.subr.mxu0 0.0
    %216 = vmatpush1.msra.mxu0 0.0
    %217 = vmatprep.subr.mxu0 0.0
    %218 = vmatpush1.msra.mxu0 0.0
    %219 = vmatprep.subr.mxu0 0.0
    %220 = vmatpush1.msra.mxu0 0.0
    %221 = vmatprep.subr.mxu0 0.0
    %222 = vmatpush1.msra.mxu0 0.0
    %223 = vmatprep.mubr.f32.mxu0 0.0
    %224 = vmatmul.mubr.f32.gmra.mrb[0].mxu0 %v157
    %v225 = vpop.f32.mrb[0].mxu0
    %v226 = vadd.f32 %v153, %v225
    %v227 = vpop.f32.mrb[0].mxu0
    %228 = vdwg.mxu0
    %v229 = vld [vmem:[%s4] sm:$0x1]
    %v231 = vlaneseq
    %v232 = vshrl.u32 %v231, 7
    %v233 = vsub.s32 0, %v232
    %v234 = vrot.slane %v229, %v233
    %v236 = vadd.f32 %v226, %v234
    %v237 = vtanh.pop %v236
    %238 = vst.msk [vmem:[#allocation10] sm:$0xff] %vm82, %v237
    // Predicated region
    $region38: #{tpu_custom_call.1} parent=1 // pred_check
      _
    $region39: #{tpu_custom_call.1} parent=1 // pred_check_branch
      %240 = sbr.rel (0) target = $region41
    $region40: #{tpu_custom_call.1} parent=1 // pred_region
      %s242 = ssub.s32 128, 128
      %243 = vsyncadd [#allocation4], %s242
      %s245 = sshll.u32 [#allocation10], 4
      %s246 = int_to_ptr.vmem [resolvable:$true] %s245
      %248 = dma.vmem_to_hbm [thread:$0]  %s246, 128, %s5, [#allocation4]
    $region41: #{tpu_custom_call.1} parent=1 // pred_fallthru
      _
    // Predicated region
    $region42: #{tpu_custom_call.1} parent=1 // pred_check
      _
    $region43: #{tpu_custom_call.1} parent=1 // pred_check_branch
      %250 = sbr.rel (0) target = $region45
    $region44: #{tpu_custom_call.1} parent=1 // pred_region
      %251 = dma.done [#allocation4], 128
    $region45: #{tpu_custom_call.1} parent=1 // pred_fallthru
      _
    %252 = vsyncpa [#allocation3], 1
    %253 = vsyncpa [#allocation6], 1
    %254 = vsyncpa [#allocation9], 1
    %255 = vsyncpa [#allocation4], 1

</llo_original>
